<compile_context>
chip_gen: v5e
topology: v5e:2x2
jax: 0.10.0
libtpu: 0.0.40
codegen_flags: <defaults>
</compile_context>

<pallas_src>
import functools

import jax
import jax.numpy as jnp
import numpy as np
from jax import lax
from jax.experimental import pallas as pl
from jax.experimental.pallas import tpu as pltpu

_SUB = 8     # f32 sublanes per vreg
_LANE = 128  # lanes per vreg


def _dfr_kernel(mask_ref, x_ref, prev_ref, out_ref, *, n_hidden):
    """One batch tile of the DFR recurrence.

    mask_ref: (H,)        SMEM (scalar-prefetched)
    x_ref:    (8, bl)     VMEM  batch tile (8 sublanes x bl lanes)
    prev_ref: (8, bl)     VMEM
    out_ref:  (H, 8, bl)  VMEM  hidden-major output tile
    """
    x = x_ref[...]
    prev = prev_ref[...]

    if n_hidden <= 32:
        # Full static unroll; per step: scalar-bcast mul + vadd + vmax + one
        # full-slab lane-dense store.  Live set: x + prev + cur only.
        for i in range(n_hidden):
            cur = jnp.maximum(mask_ref[i] * x + 0.8 * prev, 0.0)
            out_ref[i] = cur
            prev = cur
    else:
        # Long recurrences: bounded live set via fori_loop carry + direct
        # dynamic-row stores (no staging pass, no out_ref reloads).
        def body(i, prev_carry):
            cur = jnp.maximum(mask_ref[i] * x + 0.8 * prev_carry, 0.0)
            out_ref[pl.ds(i, 1)] = cur[None]
            return cur

        lax.fori_loop(0, n_hidden, body, prev, unroll=8)


def _pick_lane_tile(n_lanes, n_hidden, max_lane_tile, vmem_budget_bytes):
    """Largest lane tile (multiple of 128, dividing n_lanes) under a VMEM budget.

    Double-buffered per-block bytes:
      x: 2*8*bl*4  +  prev: 2*8*bl*4  +  out: 2*H*8*bl*4  = 64*bl*(H+2).
    """
    cap = vmem_budget_bytes // (64 * (n_hidden + 2))
    cap = min(cap, max_lane_tile, n_lanes)
    if n_lanes >= 2 * _LANE:
        cap = min(cap, n_lanes // 2)  # >= 2 grid blocks so both v7x TCs get work
    cap = max(_LANE, (int(cap) // _LANE) * _LANE)
    for cand in range(cap, _LANE - 1, -_LANE):
        if n_lanes % cand == 0:
            return cand
    return _LANE


def dfr_cell_forward(x, prev_output, mask, *, max_lane_tile=2048,
                     vmem_budget_bytes=20 << 20):
    """Pallas implementation of NewDFRCell.forward.

    Args:
      x:           any shape with B total elements (viewed as (B, 1))
      prev_output: (B, 1) float32
      mask:        (1, n_hidden) float32 (non-trainable parameter)

    Returns:
      (output (B, n_hidden), prev_output (B, 1))
    """
    xf = jnp.asarray(x, jnp.float32).reshape(-1)
    pf = jnp.asarray(prev_output, jnp.float32).reshape(-1)
    mf = jnp.asarray(mask, jnp.float32).reshape(-1)

    b = xf.shape[0]
    n_hidden = mf.shape[0]

    # Pad batch to a multiple of 8*128 so every value is whole (8,128) vregs and
    # every store is lane-dense / unmasked.  Pad contributes relu(0)=0, sliced
    # off afterwards.
    tile = _SUB * _LANE
    bp = ((b + tile - 1) // tile) * tile
    if bp != b:
        xf = jnp.pad(xf, (0, bp - b))
        pf = jnp.pad(pf, (0, bp - b))

    n_lanes = bp // _SUB
    xp = xf.reshape(_SUB, n_lanes)   # batch b -> (b // n_lanes, b % n_lanes)
    pp = pf.reshape(_SUB, n_lanes)

    bl = _pick_lane_tile(n_lanes, n_hidden, max_lane_tile, vmem_budget_bytes)
    grid = (n_lanes // bl,)

    vmem_block_bytes = 64 * bl * (n_hidden + 2)        # double-buffered blocks
    vmem_limit = int(max(32 << 20, vmem_block_bytes + (4 << 20)))

    kernel = functools.partial(_dfr_kernel, n_hidden=n_hidden)

    out_p = pl.pallas_call(
        kernel,
        out_shape=jax.ShapeDtypeStruct((n_hidden, _SUB, n_lanes), jnp.float32),
        grid_spec=pltpu.PrefetchScalarGridSpec(
            num_scalar_prefetch=1,                      # mask -> SMEM scalars
            grid=grid,
            in_specs=[
                pl.BlockSpec((_SUB, bl), lambda i, m: (0, i)),   # x    tile
                pl.BlockSpec((_SUB, bl), lambda i, m: (0, i)),   # prev tile
            ],
            out_specs=pl.BlockSpec((n_hidden, _SUB, bl),
                                   lambda i, m: (0, 0, i)),
        ),
        compiler_params=pltpu.CompilerParams(
            # TODO(synk): on v7x, CORE_PARALLEL / core_map on the batch axis
            # would guarantee real 2-TC sharding.
            dimension_semantics=("parallel",),
            vmem_limit_bytes=vmem_limit,
        ),
    )(mf, xp, pp)

    # (H, 8, L) hidden-major -> (B, H); `last` is just the final column.
    out = out_p.transpose(1, 2, 0).reshape(bp, n_hidden)[:b]
    last = out[:, n_hidden - 1:n_hidden]
    return out, last


def _reference(x, prev_output, mask):
    """Pure-numpy reference mirroring the PyTorch forward."""
    x = np.asarray(x, np.float32).reshape(-1, 1)
    prev = np.asarray(prev_output, np.float32).reshape(-1, 1)
    mask = np.asarray(mask, np.float32).reshape(1, -1)
    outs = []
    for i in range(mask.shape[1]):
        cur = np.maximum(x * mask[0, i] + 0.8 * prev, 0.0)
        prev = cur
        outs.append(cur)
    return np.concatenate(outs, axis=1), prev


if __name__ == "__main__":
    # --- Module-default sizes: B=16, n_hidden=10 (static-unroll path) ---
    k_x, k_prev, k_mask = jax.random.split(jax.random.PRNGKey(0), 3)
    B, N_HIDDEN = 16, 10
    mask = jax.random.uniform(k_mask, (1, N_HIDDEN), jnp.float32,
                              minval=-0.5, maxval=0.5)
    x = jax.random.normal(k_x, (B,), jnp.float32)
    prev_output = jax.random.normal(k_prev, (B, 1), jnp.float32)

    out, last = dfr_cell_forward(x, prev_output, mask)
    out = jax.block_until_ready(out)
    last = jax.block_until_ready(last)

    ref_out, ref_last = _reference(np.asarray(x), np.asarray(prev_output),
                                   np.asarray(mask))
    np.testing.assert_allclose(np.asarray(out), ref_out, rtol=1e-5, atol=1e-5)
    np.testing.assert_allclose(np.asarray(last), ref_last, rtol=1e-5, atol=1e-5)

    # --- Larger config: non-128-divisible batch (padding), fori path, grid>1 ---
    k_x2, k_prev2, k_mask2 = jax.random.split(jax.random.PRNGKey(1), 3)
    B2, H2 = 2085, 72
    mask2 = jax.random.uniform(k_mask2, (1, H2), jnp.float32,
                               minval=-0.5, maxval=0.5)
    x2 = jax.random.normal(k_x2, (B2,), jnp.float32)
    prev2 = jax.random.normal(k_prev2, (B2, 1), jnp.float32)

    out2, last2 = dfr_cell_forward(x2, prev2, mask2)
    out2 = jax.block_until_ready(out2)
    last2 = jax.block_until_ready(last2)

    ref_out2, ref_last2 = _reference(np.asarray(x2), np.asarray(prev2),
                                     np.asarray(mask2))
    np.testing.assert_allclose(np.asarray(out2), ref_out2, rtol=1e-5, atol=1e-5)
    np.testing.assert_allclose(np.asarray(last2), ref_last2, rtol=1e-5, atol=1e-5)

    print("KERNEL_OK")
</pallas_src>

<mosaic_0001>
module attributes {stable_mosaic.version = 11 : i64} {
  func.func @_dfr_kernel(%arg0: i32, %arg1: memref<10xf32, #tpu.memory_space<smem>>, %arg2: memref<8x128xf32, #tpu.memory_space<vmem>>, %arg3: memref<8x128xf32, #tpu.memory_space<vmem>>, %arg4: memref<10x8x128xf32, #tpu.memory_space<vmem>>) attributes {dimension_semantics = [#tpu.dimension_semantics<parallel>], iteration_bounds = array<i64: 1>, scalar_prefetch = 1 : i64, scratch_operands = 0 : i64, tpu.core_type = #tpu.core_type<tc>, window_params = [{transform_indices = @transform_0, window_bounds = array<i64: 8, 128>}, {transform_indices = @transform_1, window_bounds = array<i64: 8, 128>}, {transform_indices = @transform_2, window_bounds = array<i64: 10, 8, 128>}]} {
    %c0 = arith.constant 0 : index
    %c0_0 = arith.constant 0 : index
    %0 = vector.load %arg2[%c0, %c0_0] : memref<8x128xf32, #tpu.memory_space<vmem>>, vector<8x128xf32>
    %c0_1 = arith.constant 0 : index
    %c0_2 = arith.constant 0 : index
    %1 = vector.load %arg3[%c0_1, %c0_2] : memref<8x128xf32, #tpu.memory_space<vmem>>, vector<8x128xf32>
    %c0_3 = arith.constant 0 : index
    %2 = memref.load %arg1[%c0_3] : memref<10xf32, #tpu.memory_space<smem>>
    %3 = vector.broadcast %2 : f32 to vector<8x128xf32>
    %4 = arith.mulf %3, %0 : vector<8x128xf32>
    %cst = arith.constant 8.000000e-01 : f32
    %5 = vector.broadcast %cst : f32 to vector<8x128xf32>
    %6 = arith.mulf %5, %1 : vector<8x128xf32>
    %7 = arith.addf %4, %6 : vector<8x128xf32>
    %cst_4 = arith.constant 0.000000e+00 : f32
    %8 = vector.broadcast %cst_4 : f32 to vector<8x128xf32>
    %9 = arith.maximumf %7, %8 : vector<8x128xf32>
    %c0_5 = arith.constant 0 : index
    %c0_6 = arith.constant 0 : index
    %c0_7 = arith.constant 0 : index
    %10 = vector.load %arg4[%c0_5, %c0_6, %c0_7] : memref<10x8x128xf32, #tpu.memory_space<vmem>>, vector<1x8x128xf32>
    %11 = vector.shape_cast %10 : vector<1x8x128xf32> to vector<8x128xf32>
    %12 = vector.shape_cast %9 : vector<8x128xf32> to vector<1x8x128xf32>
    tpu.vector_store %arg4[%c0_5, %c0_6, %c0_7], %12 {strides = array<i32>} : memref<10x8x128xf32, #tpu.memory_space<vmem>>, vector<1x8x128xf32>,
    %c1 = arith.constant 1 : index
    %13 = memref.load %arg1[%c1] : memref<10xf32, #tpu.memory_space<smem>>
    %14 = vector.broadcast %13 : f32 to vector<8x128xf32>
    %15 = arith.mulf %14, %0 : vector<8x128xf32>
    %cst_8 = arith.constant 8.000000e-01 : f32
    %16 = vector.broadcast %cst_8 : f32 to vector<8x128xf32>
    %17 = arith.mulf %16, %9 : vector<8x128xf32>
    %18 = arith.addf %15, %17 : vector<8x128xf32>
    %cst_9 = arith.constant 0.000000e+00 : f32
    %19 = vector.broadcast %cst_9 : f32 to vector<8x128xf32>
    %20 = arith.maximumf %18, %19 : vector<8x128xf32>
    %c1_10 = arith.constant 1 : index
    %c0_11 = arith.constant 0 : index
    %c0_12 = arith.constant 0 : index
    %21 = vector.load %arg4[%c1_10, %c0_11, %c0_12] : memref<10x8x128xf32, #tpu.memory_space<vmem>>, vector<1x8x128xf32>
    %22 = vector.shape_cast %21 : vector<1x8x128xf32> to vector<8x128xf32>
    %23 = vector.shape_cast %20 : vector<8x128xf32> to vector<1x8x128xf32>
    tpu.vector_store %arg4[%c1_10, %c0_11, %c0_12], %23 {strides = array<i32>} : memref<10x8x128xf32, #tpu.memory_space<vmem>>, vector<1x8x128xf32>,
    %c2 = arith.constant 2 : index
    %24 = memref.load %arg1[%c2] : memref<10xf32, #tpu.memory_space<smem>>
    %25 = vector.broadcast %24 : f32 to vector<8x128xf32>
    %26 = arith.mulf %25, %0 : vector<8x128xf32>
    %cst_13 = arith.constant 8.000000e-01 : f32
    %27 = vector.broadcast %cst_13 : f32 to vector<8x128xf32>
    %28 = arith.mulf %27, %20 : vector<8x128xf32>
    %29 = arith.addf %26, %28 : vector<8x128xf32>
    %cst_14 = arith.constant 0.000000e+00 : f32
    %30 = vector.broadcast %cst_14 : f32 to vector<8x128xf32>
    %31 = arith.maximumf %29, %30 : vector<8x128xf32>
    %c2_15 = arith.constant 2 : index
    %c0_16 = arith.constant 0 : index
    %c0_17 = arith.constant 0 : index
    %32 = vector.load %arg4[%c2_15, %c0_16, %c0_17] : memref<10x8x128xf32, #tpu.memory_space<vmem>>, vector<1x8x128xf32>
    %33 = vector.shape_cast %32 : vector<1x8x128xf32> to vector<8x128xf32>
    %34 = vector.shape_cast %31 : vector<8x128xf32> to vector<1x8x128xf32>
    tpu.vector_store %arg4[%c2_15, %c0_16, %c0_17], %34 {strides = array<i32>} : memref<10x8x128xf32, #tpu.memory_space<vmem>>, vector<1x8x128xf32>,
    %c3 = arith.constant 3 : index
    %35 = memref.load %arg1[%c3] : memref<10xf32, #tpu.memory_space<smem>>
    %36 = vector.broadcast %35 : f32 to vector<8x128xf32>
    %37 = arith.mulf %36, %0 : vector<8x128xf32>
    %cst_18 = arith.constant 8.000000e-01 : f32
    %38 = vector.broadcast %cst_18 : f32 to vector<8x128xf32>
    %39 = arith.mulf %38, %31 : vector<8x128xf32>
    %40 = arith.addf %37, %39 : vector<8x128xf32>
    %cst_19 = arith.constant 0.000000e+00 : f32
    %41 = vector.broadcast %cst_19 : f32 to vector<8x128xf32>
    %42 = arith.maximumf %40, %41 : vector<8x128xf32>
    %c3_20 = arith.constant 3 : index
    %c0_21 = arith.constant 0 : index
    %c0_22 = arith.constant 0 : index
    %43 = vector.load %arg4[%c3_20, %c0_21, %c0_22] : memref<10x8x128xf32, #tpu.memory_space<vmem>>, vector<1x8x128xf32>
    %44 = vector.shape_cast %43 : vector<1x8x128xf32> to vector<8x128xf32>
    %45 = vector.shape_cast %42 : vector<8x128xf32> to vector<1x8x128xf32>
    tpu.vector_store %arg4[%c3_20, %c0_21, %c0_22], %45 {strides = array<i32>} : memref<10x8x128xf32, #tpu.memory_space<vmem>>, vector<1x8x128xf32>,
    %c4 = arith.constant 4 : index
    %46 = memref.load %arg1[%c4] : memref<10xf32, #tpu.memory_space<smem>>
    %47 = vector.broadcast %46 : f32 to vector<8x128xf32>
    %48 = arith.mulf %47, %0 : vector<8x128xf32>
    %cst_23 = arith.constant 8.000000e-01 : f32
    %49 = vector.broadcast %cst_23 : f32 to vector<8x128xf32>
    %50 = arith.mulf %49, %42 : vector<8x128xf32>
    %51 = arith.addf %48, %50 : vector<8x128xf32>
    %cst_24 = arith.constant 0.000000e+00 : f32
    %52 = vector.broadcast %cst_24 : f32 to vector<8x128xf32>
    %53 = arith.maximumf %51, %52 : vector<8x128xf32>
    %c4_25 = arith.constant 4 : index
    %c0_26 = arith.constant 0 : index
    %c0_27 = arith.constant 0 : index
    %54 = vector.load %arg4[%c4_25, %c0_26, %c0_27] : memref<10x8x128xf32, #tpu.memory_space<vmem>>, vector<1x8x128xf32>
    %55 = vector.shape_cast %54 : vector<1x8x128xf32> to vector<8x128xf32>
    %56 = vector.shape_cast %53 : vector<8x128xf32> to vector<1x8x128xf32>
    tpu.vector_store %arg4[%c4_25, %c0_26, %c0_27], %56 {strides = array<i32>} : memref<10x8x128xf32, #tpu.memory_space<vmem>>, vector<1x8x128xf32>,
    %c5 = arith.constant 5 : index
    %57 = memref.load %arg1[%c5] : memref<10xf32, #tpu.memory_space<smem>>
    %58 = vector.broadcast %57 : f32 to vector<8x128xf32>
    %59 = arith.mulf %58, %0 : vector<8x128xf32>
    %cst_28 = arith.constant 8.000000e-01 : f32
    %60 = vector.broadcast %cst_28 : f32 to vector<8x128xf32>
    %61 = arith.mulf %60, %53 : vector<8x128xf32>
    %62 = arith.addf %59, %61 : vector<8x128xf32>
    %cst_29 = arith.constant 0.000000e+00 : f32
    %63 = vector.broadcast %cst_29 : f32 to vector<8x128xf32>
    %64 = arith.maximumf %62, %63 : vector<8x128xf32>
    %c5_30 = arith.constant 5 : index
    %c0_31 = arith.constant 0 : index
    %c0_32 = arith.constant 0 : index
    %65 = vector.load %arg4[%c5_30, %c0_31, %c0_32] : memref<10x8x128xf32, #tpu.memory_space<vmem>>, vector<1x8x128xf32>
    %66 = vector.shape_cast %65 : vector<1x8x128xf32> to vector<8x128xf32>
    %67 = vector.shape_cast %64 : vector<8x128xf32> to vector<1x8x128xf32>
    tpu.vector_store %arg4[%c5_30, %c0_31, %c0_32], %67 {strides = array<i32>} : memref<10x8x128xf32, #tpu.memory_space<vmem>>, vector<1x8x128xf32>,
    %c6 = arith.constant 6 : index
    %68 = memref.load %arg1[%c6] : memref<10xf32, #tpu.memory_space<smem>>
    %69 = vector.broadcast %68 : f32 to vector<8x128xf32>
    %70 = arith.mulf %69, %0 : vector<8x128xf32>
    %cst_33 = arith.constant 8.000000e-01 : f32
    %71 = vector.broadcast %cst_33 : f32 to vector<8x128xf32>
    %72 = arith.mulf %71, %64 : vector<8x128xf32>
    %73 = arith.addf %70, %72 : vector<8x128xf32>
    %cst_34 = arith.constant 0.000000e+00 : f32
    %74 = vector.broadcast %cst_34 : f32 to vector<8x128xf32>
    %75 = arith.maximumf %73, %74 : vector<8x128xf32>
    %c6_35 = arith.constant 6 : index
    %c0_36 = arith.constant 0 : index
    %c0_37 = arith.constant 0 : index
    %76 = vector.load %arg4[%c6_35, %c0_36, %c0_37] : memref<10x8x128xf32, #tpu.memory_space<vmem>>, vector<1x8x128xf32>
    %77 = vector.shape_cast %76 : vector<1x8x128xf32> to vector<8x128xf32>
    %78 = vector.shape_cast %75 : vector<8x128xf32> to vector<1x8x128xf32>
    tpu.vector_store %arg4[%c6_35, %c0_36, %c0_37], %78 {strides = array<i32>} : memref<10x8x128xf32, #tpu.memory_space<vmem>>, vector<1x8x128xf32>,
    %c7 = arith.constant 7 : index
    %79 = memref.load %arg1[%c7] : memref<10xf32, #tpu.memory_space<smem>>
    %80 = vector.broadcast %79 : f32 to vector<8x128xf32>
    %81 = arith.mulf %80, %0 : vector<8x128xf32>
    %cst_38 = arith.constant 8.000000e-01 : f32
    %82 = vector.broadcast %cst_38 : f32 to vector<8x128xf32>
    %83 = arith.mulf %82, %75 : vector<8x128xf32>
    %84 = arith.addf %81, %83 : vector<8x128xf32>
    %cst_39 = arith.constant 0.000000e+00 : f32
    %85 = vector.broadcast %cst_39 : f32 to vector<8x128xf32>
    %86 = arith.maximumf %84, %85 : vector<8x128xf32>
    %c7_40 = arith.constant 7 : index
    %c0_41 = arith.constant 0 : index
    %c0_42 = arith.constant 0 : index
    %87 = vector.load %arg4[%c7_40, %c0_41, %c0_42] : memref<10x8x128xf32, #tpu.memory_space<vmem>>, vector<1x8x128xf32>
    %88 = vector.shape_cast %87 : vector<1x8x128xf32> to vector<8x128xf32>
    %89 = vector.shape_cast %86 : vector<8x128xf32> to vector<1x8x128xf32>
    tpu.vector_store %arg4[%c7_40, %c0_41, %c0_42], %89 {strides = array<i32>} : memref<10x8x128xf32, #tpu.memory_space<vmem>>, vector<1x8x128xf32>,
    %c8 = arith.constant 8 : index
    %90 = memref.load %arg1[%c8] : memref<10xf32, #tpu.memory_space<smem>>
    %91 = vector.broadcast %90 : f32 to vector<8x128xf32>
    %92 = arith.mulf %91, %0 : vector<8x128xf32>
    %cst_43 = arith.constant 8.000000e-01 : f32
    %93 = vector.broadcast %cst_43 : f32 to vector<8x128xf32>
    %94 = arith.mulf %93, %86 : vector<8x128xf32>
    %95 = arith.addf %92, %94 : vector<8x128xf32>
    %cst_44 = arith.constant 0.000000e+00 : f32
    %96 = vector.broadcast %cst_44 : f32 to vector<8x128xf32>
    %97 = arith.maximumf %95, %96 : vector<8x128xf32>
    %c8_45 = arith.constant 8 : index
    %c0_46 = arith.constant 0 : index
    %c0_47 = arith.constant 0 : index
    %98 = vector.load %arg4[%c8_45, %c0_46, %c0_47] : memref<10x8x128xf32, #tpu.memory_space<vmem>>, vector<1x8x128xf32>
    %99 = vector.shape_cast %98 : vector<1x8x128xf32> to vector<8x128xf32>
    %100 = vector.shape_cast %97 : vector<8x128xf32> to vector<1x8x128xf32>
    tpu.vector_store %arg4[%c8_45, %c0_46, %c0_47], %100 {strides = array<i32>} : memref<10x8x128xf32, #tpu.memory_space<vmem>>, vector<1x8x128xf32>,
    %c9 = arith.constant 9 : index
    %101 = memref.load %arg1[%c9] : memref<10xf32, #tpu.memory_space<smem>>
    %102 = vector.broadcast %101 : f32 to vector<8x128xf32>
    %103 = arith.mulf %102, %0 : vector<8x128xf32>
    %cst_48 = arith.constant 8.000000e-01 : f32
    %104 = vector.broadcast %cst_48 : f32 to vector<8x128xf32>
    %105 = arith.mulf %104, %97 : vector<8x128xf32>
    %106 = arith.addf %103, %105 : vector<8x128xf32>
    %cst_49 = arith.constant 0.000000e+00 : f32
    %107 = vector.broadcast %cst_49 : f32 to vector<8x128xf32>
    %108 = arith.maximumf %106, %107 : vector<8x128xf32>
    %c9_50 = arith.constant 9 : index
    %c0_51 = arith.constant 0 : index
    %c0_52 = arith.constant 0 : index
    %109 = vector.load %arg4[%c9_50, %c0_51, %c0_52] : memref<10x8x128xf32, #tpu.memory_space<vmem>>, vector<1x8x128xf32>
    %110 = vector.shape_cast %109 : vector<1x8x128xf32> to vector<8x128xf32>
    %111 = vector.shape_cast %108 : vector<8x128xf32> to vector<1x8x128xf32>
    tpu.vector_store %arg4[%c9_50, %c0_51, %c0_52], %111 {strides = array<i32>} : memref<10x8x128xf32, #tpu.memory_space<vmem>>, vector<1x8x128xf32>,
    return
  }
  func.func @transform_0(%arg0: i32, %arg1: memref<10xf32, #tpu.memory_space<smem>>) -> (i32, i32) {
    %c0_i32 = arith.constant 0 : i32
    %c0_i32_0 = arith.constant 0 : i32
    return %c0_i32, %arg0 : i32, i32
  }
  func.func @transform_1(%arg0: i32, %arg1: memref<10xf32, #tpu.memory_space<smem>>) -> (i32, i32) {
    %c0_i32 = arith.constant 0 : i32
    %c0_i32_0 = arith.constant 0 : i32
    return %c0_i32, %arg0 : i32, i32
  }
  func.func @transform_2(%arg0: i32, %arg1: memref<10xf32, #tpu.memory_space<smem>>) -> (i32, i32, i32) {
    %c0_i32 = arith.constant 0 : i32
    %c0_i32_0 = arith.constant 0 : i32
    %c0_i32_1 = arith.constant 0 : i32
    return %c0_i32, %c0_i32_0, %arg0 : i32, i32, i32
  }
}

</mosaic_0001>

<llo_original>
// kernel: tpu_custom_call.1
$region0: #{tpu_custom_call.1}
  #allocation0 [shape = 'u32[]', space=smem, size = 0x4, offset = 0x4, fixed_abs, tag = 'smem constant byte address 0x4 - core index']
  #allocation1 [shape = 'u32[72,128]{1,0:T(1,128)}', space=vmem, size = 0x9000, scoped, tag = 'internal scratch']
  #allocation2 [shape = 's32[1]{0}', space=sflag, size = 0x4, scoped, tag = 'scoped memory for tpu_custom_call.1']
  #allocation3 [shape = 'u8[512]{0}', space=smem, size = 0x200, scoped, tag = 'prefetched SMEM operand 0']
  %s0 = inlined_call_operand.hbm [shape: f32[10], index: 0, kind: input, shape index: {}]
  %s1 = inlined_call_operand.hbm [shape: f32[8,128], index: 1, kind: input, shape index: {}]
  %s2 = inlined_call_operand.hbm [shape: f32[8,128], index: 2, kind: input, shape index: {}]
  %s3 = inlined_call_operand.hbm [shape: f32[10,8,128], index: 3, kind: output, shape index: {}]
  %s4 = sld [smem:[#allocation0]]
  $region26: #{tpu_custom_call.1} parent=0
    _
  %s6 = ssub.s32 1, %s4
  %s7 = scalar_select 0, %s6, %s4
  %s9 = sshll.u32 %s0, 4
  %s10 = int_to_ptr.hbm [resolvable:$true] %s9
  %12 = dma.hbm_to_smem %s10, 16, [#allocation3], [#allocation2]
  %14 = dma.done [#allocation2], 16
  %15 = sfence
  $region1: #{tpu_custom_call.1} parent=0
    #allocation4 [shape = 'u8[4096]{0}', space=vmem, size = 0x1000, scoped, tag = 'input window, operand 1, single buffered']
    #allocation5 [shape = 's32[1]{0}', space=sflag, size = 0x4, scoped, tag = 'scoped memory for tpu_custom_call.1']
    #allocation6 [shape = 's32[1]{0}', space=sflag, size = 0x4, scoped, tag = 'scoped memory for tpu_custom_call.1']
    #allocation7 [shape = 'u8[4096]{0}', space=vmem, size = 0x1000, scoped, tag = 'input window, operand 2, single buffered']
    #allocation8 [shape = 's32[1]{0}', space=sflag, size = 0x4, scoped, tag = 'scoped memory for tpu_custom_call.1']
    #allocation9 [shape = 'u8[40960]{0}', space=vmem, size = 0xa000, scoped, tag = 'output window, operand 0, single buffered']
    %16 = vsyncpa [#allocation5], 0
    %17 = vsyncpa [#allocation8], 0
    %18 = vsyncpa [#allocation6], 0
    // Predicated region
    $region2: #{tpu_custom_call.1} parent=1 // pred_check
      _
    $region3: #{tpu_custom_call.1} parent=1 // pred_check_branch
      %20 = sbr.rel (0) target = $region5
    $region4: #{tpu_custom_call.1} parent=1 // pred_region
      %22 = vsyncadd [#allocation5], 0
      %s24 = sshll.u32 %s1, 4
      %s25 = int_to_ptr.hbm [resolvable:$true] %s24
      %s26 = sshll.u32 [#allocation4], 4
      %s27 = int_to_ptr.vmem [resolvable:$true] %s26
      %29 = dma.hbm_to_vmem [thread:$0]  %s25, 128, %s27, [#allocation5]
    $region5: #{tpu_custom_call.1} parent=1 // pred_fallthru
      _
    // Predicated region
    $region6: #{tpu_custom_call.1} parent=1 // pred_check
      _
    $region7: #{tpu_custom_call.1} parent=1 // pred_check_branch
      %31 = sbr.rel (0) target = $region9
    $region8: #{tpu_custom_call.1} parent=1 // pred_region
      %33 = vsyncadd [#allocation8], 0
      %s35 = sshll.u32 %s2, 4
      %s36 = int_to_ptr.hbm [resolvable:$true] %s35
      %s37 = sshll.u32 [#allocation7], 4
      %s38 = int_to_ptr.vmem [resolvable:$true] %s37
      %40 = dma.hbm_to_vmem [thread:$0]  %s36, 128, %s38, [#allocation8]
    $region9: #{tpu_custom_call.1} parent=1 // pred_fallthru
      _
    // Predicated region
    $region10: #{tpu_custom_call.1} parent=1 // pred_check
      _
    $region11: #{tpu_custom_call.1} parent=1 // pred_check_branch
      %42 = sbr.rel (0) target = $region13
    $region12: #{tpu_custom_call.1} parent=1 // pred_region
      %44 = dma.done [#allocation5], 128
    $region13: #{tpu_custom_call.1} parent=1 // pred_fallthru
      _
    // Predicated region
    $region14: #{tpu_custom_call.1} parent=1 // pred_check
      _
    $region15: #{tpu_custom_call.1} parent=1 // pred_check_branch
      %46 = sbr.rel (0) target = $region17
    $region16: #{tpu_custom_call.1} parent=1 // pred_region
      %48 = dma.done [#allocation8], 128
    $region17: #{tpu_custom_call.1} parent=1 // pred_fallthru
      _
    %v49 = vld [vmem:[#allocation4] sm:$0xff]
    %v50 = vld [vmem:[#allocation7] sm:$0xff]
    %s51 = sld [smem:[#allocation3]]
    %v52 = vstv %s51
    %v53 = vmul.f32 %v52, %v49
    %v54 = vmul.f32 %v50, 0.8
    %v55 = vadd.f32 %v53, %v54
    %v56 = vmax.f32 %v55, 0.0
    %57 = vst [vmem:[#allocation9] sm:$0xff] %v56
    %s58 = sld [smem:[#allocation3 + $0x1]]
    %v59 = vstv %s58
    %v60 = vmul.f32 %v59, %v49
    %v61 = vmul.f32 %v56, 0.8
    %v62 = vadd.f32 %v60, %v61
    %v63 = vmax.f32 %v62, 0.0
    %s64 = scalar_lea.vmem [#allocation9], 8
    %65 = vst [vmem:[%s64] sm:$0xff] %v63
    %s66 = sld [smem:[#allocation3 + $0x2]]
    %v67 = vstv %s66
    %v68 = vmul.f32 %v67, %v49
    %v69 = vmul.f32 %v63, 0.8
    %v70 = vadd.f32 %v68, %v69
    %v71 = vmax.f32 %v70, 0.0
    %s72 = scalar_lea.vmem [#allocation9], 16
    %73 = vst [vmem:[%s72] sm:$0xff] %v71
    %s74 = sld [smem:[#allocation3 + $0x3]]
    %v75 = vstv %s74
    %v76 = vmul.f32 %v75, %v49
    %v77 = vmul.f32 %v71, 0.8
    %v78 = vadd.f32 %v76, %v77
    %v79 = vmax.f32 %v78, 0.0
    %s80 = scalar_lea.vmem [#allocation9], 24
    %81 = vst [vmem:[%s80] sm:$0xff] %v79
    %s82 = sld [smem:[#allocation3 + $0x4]]
    %v83 = vstv %s82
    %v84 = vmul.f32 %v83, %v49
    %v85 = vmul.f32 %v79, 0.8
    %v86 = vadd.f32 %v84, %v85
    %v87 = vmax.f32 %v86, 0.0
    %s88 = scalar_lea.vmem [#allocation9], 32
    %89 = vst [vmem:[%s88] sm:$0xff] %v87
    %s90 = sld [smem:[#allocation3 + $0x5]]
    %v91 = vstv %s90
    %v92 = vmul.f32 %v91, %v49
    %v93 = vmul.f32 %v87, 0.8
    %v94 = vadd.f32 %v92, %v93
    %v95 = vmax.f32 %v94, 0.0
    %s96 = scalar_lea.vmem [#allocation9], 40
    %97 = vst [vmem:[%s96] sm:$0xff] %v95
    %s98 = sld [smem:[#allocation3 + $0x6]]
    %v99 = vstv %s98
    %v100 = vmul.f32 %v99, %v49
    %v101 = vmul.f32 %v95, 0.8
    %v102 = vadd.f32 %v100, %v101
    %v103 = vmax.f32 %v102, 0.0
    %s104 = scalar_lea.vmem [#allocation9], 48
    %105 = vst [vmem:[%s104] sm:$0xff] %v103
    %s106 = sld [smem:[#allocation3 + $0x7]]
    %v107 = vstv %s106
    %v108 = vmul.f32 %v107, %v49
    %v109 = vmul.f32 %v103, 0.8
    %v110 = vadd.f32 %v108, %v109
    %v111 = vmax.f32 %v110, 0.0
    %s112 = scalar_lea.vmem [#allocation9], 56
    %113 = vst [vmem:[%s112] sm:$0xff] %v111
    %s114 = sld [smem:[#allocation3 + $0x8]]
    %v115 = vstv %s114
    %v116 = vmul.f32 %v115, %v49
    %v117 = vmul.f32 %v111, 0.8
    %v118 = vadd.f32 %v116, %v117
    %v119 = vmax.f32 %v118, 0.0
    %s120 = scalar_lea.vmem [#allocation9], 64
    %121 = vst [vmem:[%s120] sm:$0xff] %v119
    %s122 = sld [smem:[#allocation3 + $0x9]]
    %v123 = vstv %s122
    %v124 = vmul.f32 %v123, %v49
    %v125 = vmul.f32 %v119, 0.8
    %v126 = vadd.f32 %v124, %v125
    %v127 = vmax.f32 %v126, 0.0
    %s128 = scalar_lea.vmem [#allocation9], 72
    %129 = vst [vmem:[%s128] sm:$0xff] %v127
    // Predicated region
    $region18: #{tpu_custom_call.1} parent=1 // pred_check
      _
    $region19: #{tpu_custom_call.1} parent=1 // pred_check_branch
      %131 = sbr.rel (0) target = $region21
    $region20: #{tpu_custom_call.1} parent=1 // pred_region
      %133 = vsyncadd [#allocation6], 0
      %s134 = sshll.u32 [#allocation9], 4
      %s135 = int_to_ptr.vmem [resolvable:$true] %s134
      %s136 = sshll.u32 %s3, 4
      %s137 = int_to_ptr.hbm [resolvable:$true] %s136
      %142 = dma.vmem_to_hbm [thread:$0]  %s135, 1280, %s137, [#allocation6], 128, 128, 8
    $region21: #{tpu_custom_call.1} parent=1 // pred_fallthru
      _
    // Predicated region
    $region22: #{tpu_custom_call.1} parent=1 // pred_check
      _
    $region23: #{tpu_custom_call.1} parent=1 // pred_check_branch
      %144 = sbr.rel (0) target = $region25
    $region24: #{tpu_custom_call.1} parent=1 // pred_region
      %146 = dma.done [#allocation6], 1280
    $region25: #{tpu_custom_call.1} parent=1 // pred_fallthru
      _
    %147 = vsyncpa [#allocation5], 1
    %148 = vsyncpa [#allocation8], 1
    %149 = vsyncpa [#allocation6], 1

</llo_original>
